<compile_context>
chip_gen: v7x
topology: tpu7x:2x2x1
jax: 0.10.0
libtpu: 0.0.40
codegen_flags: <defaults>
</compile_context>

<pallas_src>
import functools

import jax
import jax.numpy as jnp
from jax.experimental import pallas as pl
from jax.experimental.pallas import tpu as pltpu


def _round_up(v, m):
    return (v + m - 1) // m * m


def _pad_cast(arr, rows, cols, dtype):
    """Zero-pad a 2-D array to (rows, cols) and cast; skip the pad when aligned."""
    r, c = arr.shape
    if (r, c) == (rows, cols):
        return arr.astype(dtype)
    out = jnp.zeros((rows, cols), dtype)
    return out.at[:r, :c].set(arr.astype(dtype))


def _vmem_cap_bytes():
    """Per-core VMEM budget with headroom for compiler-internal scratch."""
    try:
        cap = int(pltpu.get_tpu_info().vmem_capacity_bytes)
    except Exception:
        cap = 64 * 1024 * 1024        # v7x per-TensorCore (smallest current part)
    return min(cap * 3 // 4, 100 * 1024 * 1024)


# -----------------------------------------------------------------------------
# Fused path: both GCN layers + the skip in one pallas_call.  A is read from
# HBM exactly once and h1 stays on-chip.  Used whenever the working set fits.
# -----------------------------------------------------------------------------
def _gcn_fused_kernel(a_ref, x_ref, rsum_ref, wt_ref, b_ref, o_ref):
    a = a_ref[...]                                    # (Np, Np)  bf16
    x32 = x_ref[...]                                  # (Np, Fp)  f32 (skip input)
    wt = wt_ref[...]                                  # (Fp, Fp)  bf16 (= W^T, padded)
    bias = rsum_ref[...] * b_ref[...]                 # (Np, Fp)  f32, hoisted once

    # Layer 1: h1 = relu((A x) W^T + rowsum(A) * b)
    ax = jnp.dot(a, x32.astype(jnp.bfloat16), preferred_element_type=jnp.float32)
    h1 = jnp.dot(ax.astype(jnp.bfloat16), wt, preferred_element_type=jnp.float32)
    h1 = jnp.maximum(h1 + bias, 0.0)

    # Layer 2: h2 = relu((A h1) W^T + rowsum(A) * b)
    ah = jnp.dot(a, h1.astype(jnp.bfloat16), preferred_element_type=jnp.float32)
    h2 = jnp.dot(ah.astype(jnp.bfloat16), wt, preferred_element_type=jnp.float32)
    h2 = jnp.maximum(h2 + bias, 0.0)

    o_ref[...] = x32 + h2


# -----------------------------------------------------------------------------
# Tiled path (large N): grid = (row blocks of A, k blocks of the A@x contraction)
# -----------------------------------------------------------------------------
def _gcn_hidden_kernel(a_ref, xin_ref, rsum_ref, wt_ref, b_ref, o_ref, acc_ref):
    """o = relu((A x) W^T + rowsum(A) * b), emitted in bf16 for the next layer."""
    k = pl.program_id(1)

    @pl.when(k == 0)
    def _init():
        acc_ref[...] = jnp.zeros_like(acc_ref)

    acc_ref[...] += jnp.dot(a_ref[...], xin_ref[...],
                            preferred_element_type=jnp.float32)

    @pl.when(k == pl.num_programs(1) - 1)
    def _finish():
        h = jnp.dot(acc_ref[...].astype(jnp.bfloat16), wt_ref[...],
                    preferred_element_type=jnp.float32)
        h = jnp.maximum(h + rsum_ref[...] * b_ref[...], 0.0)
        o_ref[...] = h.astype(o_ref.dtype)


def _gcn_skip_kernel(a_ref, xin_ref, rsum_ref, wt_ref, b_ref, skip_ref, o_ref):
    """o = skip + relu((A h) W^T + rowsum(A) * b); A@h accumulates into o_ref."""
    k = pl.program_id(1)

    @pl.when(k == 0)
    def _init():
        o_ref[...] = jnp.zeros_like(o_ref)

    # The output block index is constant along k, so the f32 output block is
    # used as the accumulator (no extra VMEM scratch); partials never hit HBM.
    o_ref[...] += jnp.dot(a_ref[...], xin_ref[...],
                          preferred_element_type=jnp.float32)

    @pl.when(k == pl.num_programs(1) - 1)
    def _finish():
        acc = o_ref[...]
        h = jnp.dot(acc.astype(jnp.bfloat16), wt_ref[...],
                    preferred_element_type=jnp.float32)
        h = jnp.maximum(h + rsum_ref[...] * b_ref[...], 0.0)
        o_ref[...] = h + skip_ref[...]


# -----------------------------------------------------------------------------
# Wrapper
# -----------------------------------------------------------------------------
def _fused_vmem_estimate(Np, Fp):
    return (2 * Np * Np          # A, bf16
            + 4 * Np * Fp        # x, f32
            + 4 * Np + 4 * Fp    # rowsum(A), bias
            + 2 * Fp * Fp        # W^T, bf16
            + 4 * Np * Fp        # output, f32
            + 28 * Np * Fp)      # live f32/bf16 intermediates (headroom)


def _tiled_vmem_estimate(tm, tk, Fp):
    return (2 * (2 * tm * tk)    # A block (bf16, double-buffered)
            + 2 * (2 * tk * Fp)  # x / h chunk (bf16)
            + 2 * (4 * tm)       # rowsum block
            + 2 * (2 * Fp * Fp)  # W^T (constant index map, conservatively x2)
            + 2 * (4 * Fp)       # bias
            + 2 * (4 * tm * Fp)  # skip row block (layer 2)
            + 2 * (4 * tm * Fp)  # output row block (f32 worst case)
            + 4 * tm * Fp)       # f32 accumulator scratch (layer 1)


def _pick_tile(n, candidates):
    for c in candidates:
        if n % c == 0:
            return c
    return candidates[-1]


@functools.partial(jax.jit, static_argnames=("mode",))
def skip_connection(x, A, W, b, mode="auto"):
    """x: (N, F) f32, A: (N, N) f32, W: (F, F) f32 (out, in), b: (F,) f32."""
    if mode not in ("auto", "fused", "tiled"):
        raise ValueError(f"unknown mode: {mode}")

    N, F = x.shape
    Fp = _round_up(F, 128)
    Np = _round_up(N, 8) if N < 128 else _round_up(N, 128)
    cap = _vmem_cap_bytes()

    # Padded / cast operands.  rowsum(A) is exact f32 and fuses with the bf16
    # cast of A in XLA (a single HBM pass over A outside the kernel).
    a_bf = _pad_cast(A, Np, Np, jnp.bfloat16)
    x_f32 = _pad_cast(x, Np, Fp, jnp.float32)                 # skip input (exact)
    wt_bf = _pad_cast(W.T, Fp, Fp, jnp.bfloat16)              # pre-transposed weight
    b_f32 = _pad_cast(b.reshape(1, F), 1, Fp, jnp.float32)
    rsum = _pad_cast(jnp.sum(A, axis=1, keepdims=True), Np, 1, jnp.float32)

    use_fused = mode == "fused" or (
        mode == "auto" and _fused_vmem_estimate(Np, Fp) * 2 <= cap)

    if use_fused:
        est = _fused_vmem_estimate(Np, Fp)
        out_p = pl.pallas_call(
            _gcn_fused_kernel,
            out_shape=jax.ShapeDtypeStruct((Np, Fp), jnp.float32),
            compiler_params=pltpu.CompilerParams(
                vmem_limit_bytes=int(min(max(2 * est, 32 * 1024 * 1024), cap))),
        )(a_bf, x_f32, rsum, wt_bf, b_f32)
        return out_p[:N, :F]

    # ------------------------- tiled two-call path -------------------------
    if N < 128:
        tm = tk = Np
    else:
        tm = _pick_tile(Np, (256, 128))
        tk = _pick_tile(Np, (512, 256, 128))
        # keep >= 2 row blocks so the "parallel" axis can use both v7x cores
        if Np // tm < 2 and (Np // 2) % 128 == 0:
            tm = Np // 2
        while _tiled_vmem_estimate(tm, tk, Fp) > cap and (tm > 128 or tk > 128):
            if tk > tm:
                tk //= 2
            else:
                tm = max(128, tm // 2)
    # TODO(synk): for very wide layers (Fp of several thousand) also tile W^T's
    # out-feature axis instead of keeping the full (Fp, Fp) block resident.

    grid = (Np // tm, Np // tk)
    est = _tiled_vmem_estimate(tm, tk, Fp)
    cparams = pltpu.CompilerParams(
        dimension_semantics=("parallel", "arbitrary"),
        vmem_limit_bytes=int(min(max(2 * est, 32 * 1024 * 1024), cap)))

    a_spec = pl.BlockSpec((tm, tk), lambda i, k: (i, k))
    xin_spec = pl.BlockSpec((tk, Fp), lambda i, k: (k, 0))
    rsum_spec = pl.BlockSpec((tm, 1), lambda i, k: (i, 0))
    # TODO(synk): on v7x, pipeline_mode=pl.Buffered(1) on wt/b specs would save
    # one resident copy of W^T (constant index map); omitted for portability.
    wt_spec = pl.BlockSpec((Fp, Fp), lambda i, k: (0, 0))
    b_spec = pl.BlockSpec((1, Fp), lambda i, k: (0, 0))
    row_spec = pl.BlockSpec((tm, Fp), lambda i, k: (i, 0))

    hidden = pl.pallas_call(
        _gcn_hidden_kernel,
        out_shape=jax.ShapeDtypeStruct((Np, Fp), jnp.bfloat16),
        grid=grid,
        in_specs=[a_spec, xin_spec, rsum_spec, wt_spec, b_spec],
        out_specs=row_spec,
        scratch_shapes=[pltpu.VMEM((tm, Fp), jnp.float32)],
        compiler_params=cparams,
    )

    skip = pl.pallas_call(
        _gcn_skip_kernel,
        out_shape=jax.ShapeDtypeStruct((Np, Fp), jnp.float32),
        grid=grid,
        in_specs=[a_spec, xin_spec, rsum_spec, wt_spec, b_spec, row_spec],
        out_specs=row_spec,
        compiler_params=cparams,
    )

    x_bf = x_f32.astype(jnp.bfloat16)                   # MXU input for layer 1
    h1 = hidden(a_bf, x_bf, rsum, wt_bf, b_f32)         # bf16 (Np, Fp)
    out_p = skip(a_bf, h1, rsum, wt_bf, b_f32, x_f32)   # f32  (Np, Fp)
    return out_p[:N, :F]


# -----------------------------------------------------------------------------
# Reference + tests
# -----------------------------------------------------------------------------
def skip_connection_ref(x, A, W, b):
    h = jnp.maximum(A @ (x @ W.T + b), 0.0)
    h = jnp.maximum(A @ (h @ W.T + b), 0.0)
    return x + h


def _max_rel_err(out, ref):
    return float(jnp.max(jnp.abs(out - ref)) / (jnp.max(jnp.abs(ref)) + 1e-6))


def _make_inputs(key, N, F):
    kx, ka, kw, kb = jax.random.split(key, 4)
    x = jax.random.normal(kx, (N, F), dtype=jnp.float32)
    A = jax.random.uniform(ka, (N, N), dtype=jnp.float32)
    bound = 1.0 / (F ** 0.5)
    W = jax.random.uniform(kw, (F, F), minval=-bound, maxval=bound,
                           dtype=jnp.float32)
    b = jax.random.uniform(kb, (F,), minval=-bound, maxval=bound,
                           dtype=jnp.float32)
    return x, A, W, b


if __name__ == "__main__":
    key = jax.random.PRNGKey(0)
    k1, k2, k3 = jax.random.split(key, 3)

    # 1) module-natural small shapes (8 nodes, 32 features) -> fused path
    x, A, W, b = _make_inputs(k1, 8, 32)
    out = jax.block_until_ready(skip_connection(x, A, W, b))
    ref = skip_connection_ref(x, A, W, b)
    assert out.shape == (8, 32)
    assert _max_rel_err(out, ref) < 3e-2, "small-shape mismatch"

    # 2) padding path (N=256, F=160), still fused (A resident in VMEM)
    x, A, W, b = _make_inputs(k2, 256, 160)
    out = jax.block_until_ready(skip_connection(x, A, W, b))
    ref = skip_connection_ref(x, A, W, b)
    assert out.shape == (256, 160)
    assert _max_rel_err(out, ref) < 3e-2, "medium-shape mismatch"

    # 3) force the row-tiled multi-block grid used for large graphs
    x, A, W, b = _make_inputs(k3, 384, 160)
    out = jax.block_until_ready(skip_connection(x, A, W, b, mode="tiled"))
    ref = skip_connection_ref(x, A, W, b)
    assert out.shape == (384, 160)
    assert _max_rel_err(out, ref) < 3e-2, "tiled-path mismatch"

    print("KERNEL_OK")
</pallas_src>

<mosaic_0001>
module attributes {stable_mosaic.version = 11 : i64} {
  func.func @_gcn_fused_kernel(%arg0: memref<8x8xbf16, #tpu.memory_space<vmem>>, %arg1: memref<8x128xf32, #tpu.memory_space<vmem>>, %arg2: memref<8x1xf32, #tpu.memory_space<vmem>>, %arg3: memref<128x128xbf16, #tpu.memory_space<vmem>>, %arg4: memref<1x128xf32, #tpu.memory_space<vmem>>, %arg5: memref<8x128xf32, #tpu.memory_space<vmem>>) attributes {dimension_semantics = [], scalar_prefetch = 0 : i64, scratch_operands = 0 : i64, tpu.core_type = #tpu.core_type<tc>} {
    %c0 = arith.constant 0 : index
    %c0_0 = arith.constant 0 : index
    %0 = vector.load %arg0[%c0, %c0_0] : memref<8x8xbf16, #tpu.memory_space<vmem>>, vector<8x8xbf16>
    %c0_1 = arith.constant 0 : index
    %c0_2 = arith.constant 0 : index
    %1 = vector.load %arg1[%c0_1, %c0_2] : memref<8x128xf32, #tpu.memory_space<vmem>>, vector<8x128xf32>
    %c0_3 = arith.constant 0 : index
    %c0_4 = arith.constant 0 : index
    %2 = vector.load %arg3[%c0_3, %c0_4] : memref<128x128xbf16, #tpu.memory_space<vmem>>, vector<128x128xbf16>
    %c0_5 = arith.constant 0 : index
    %c0_6 = arith.constant 0 : index
    %3 = vector.load %arg2[%c0_5, %c0_6] : memref<8x1xf32, #tpu.memory_space<vmem>>, vector<8x1xf32>
    %c0_7 = arith.constant 0 : index
    %c0_8 = arith.constant 0 : index
    %4 = vector.load %arg4[%c0_7, %c0_8] : memref<1x128xf32, #tpu.memory_space<vmem>>, vector<1x128xf32>
    %5 = vector.broadcast %3 : vector<8x1xf32> to vector<8x128xf32>
    %6 = vector.broadcast %4 : vector<1x128xf32> to vector<8x128xf32>
    %7 = arith.mulf %5, %6 : vector<8x128xf32>
    %8 = arith.truncf %1 : vector<8x128xf32> to vector<8x128xbf16>
    %cst = arith.constant dense<0.000000e+00> : vector<8x128xf32>
    %9 = tpu.matmul %0, %8, %cst {dimension_numbers = #tpu.dot_dimension_numbers<[1], [0], [0], [1], [0, 0, 1, 1], [], []>} : vector<8x8xbf16>, vector<8x128xbf16>, vector<8x128xf32> -> vector<8x128xf32>
    %10 = arith.truncf %9 : vector<8x128xf32> to vector<8x128xbf16>
    %cst_9 = arith.constant dense<0.000000e+00> : vector<8x128xf32>
    %11 = tpu.matmul %10, %2, %cst_9 {dimension_numbers = #tpu.dot_dimension_numbers<[1], [0], [0], [1], [0, 0, 1, 1], [], []>} : vector<8x128xbf16>, vector<128x128xbf16>, vector<8x128xf32> -> vector<8x128xf32>
    %12 = arith.addf %11, %7 : vector<8x128xf32>
    %cst_10 = arith.constant 0.000000e+00 : f32
    %13 = vector.broadcast %cst_10 : f32 to vector<8x128xf32>
    %14 = arith.maximumf %12, %13 : vector<8x128xf32>
    %15 = arith.truncf %14 : vector<8x128xf32> to vector<8x128xbf16>
    %cst_11 = arith.constant dense<0.000000e+00> : vector<8x128xf32>
    %16 = tpu.matmul %0, %15, %cst_11 {dimension_numbers = #tpu.dot_dimension_numbers<[1], [0], [0], [1], [0, 0, 1, 1], [], []>} : vector<8x8xbf16>, vector<8x128xbf16>, vector<8x128xf32> -> vector<8x128xf32>
    %17 = arith.truncf %16 : vector<8x128xf32> to vector<8x128xbf16>
    %cst_12 = arith.constant dense<0.000000e+00> : vector<8x128xf32>
    %18 = tpu.matmul %17, %2, %cst_12 {dimension_numbers = #tpu.dot_dimension_numbers<[1], [0], [0], [1], [0, 0, 1, 1], [], []>} : vector<8x128xbf16>, vector<128x128xbf16>, vector<8x128xf32> -> vector<8x128xf32>
    %19 = arith.addf %18, %7 : vector<8x128xf32>
    %cst_13 = arith.constant 0.000000e+00 : f32
    %20 = vector.broadcast %cst_13 : f32 to vector<8x128xf32>
    %21 = arith.maximumf %19, %20 : vector<8x128xf32>
    %22 = arith.addf %1, %21 : vector<8x128xf32>
    %c0_14 = arith.constant 0 : index
    %c0_15 = arith.constant 0 : index
    %23 = vector.load %arg5[%c0_14, %c0_15] : memref<8x128xf32, #tpu.memory_space<vmem>>, vector<8x128xf32>
    tpu.vector_store %arg5[%c0_14, %c0_15], %22 {strides = array<i32>} : memref<8x128xf32, #tpu.memory_space<vmem>>, vector<8x128xf32>,
    return
  }
}

</mosaic_0001>

<llo_original>
// kernel: skip_connection.1
$region0: #{skip_connection.1}
  #allocation0 [shape = 'u32[]', space=smem, size = 0x4, offset = 0x4, fixed_abs, tag = 'smem constant byte address 0x4 - core index']
  #allocation1 [shape = 'u32[144,128]{1,0:T(1,128)}', space=vmem, size = 0x12000, scoped, tag = 'internal scratch']
  %s0 = inlined_call_operand.vmem [shape: bf16[8,8], index: 0, kind: input, shape index: {}]
  %s1 = inlined_call_operand.vmem [shape: f32[8,128], index: 1, kind: input, shape index: {}]
  %s2 = inlined_call_operand.vmem [shape: f32[8,1], index: 2, kind: input, shape index: {}]
  %s3 = inlined_call_operand.vmem [shape: bf16[128,128], index: 3, kind: input, shape index: {}]
  %s4 = inlined_call_operand.vmem [shape: f32[1,128], index: 4, kind: input, shape index: {}]
  %s5 = inlined_call_operand.hbm [shape: f32[8,128], index: 5, kind: output, shape index: {}]
  %s6 = sld [smem:[#allocation0]]
  $region30: #{skip_connection.1} parent=0
    _
  %s8 = ssub.s32 1, %s6
  %s9 = scalar_select 0, %s8, %s6
  $region1: #{skip_connection.1} parent=0
    #allocation2 [shape = 'u8[4096]{0}', space=vmem, size = 0x1000, scoped, tag = 'output window, operand 0, single buffered']
    #allocation3 [shape = 's32[1]{0}', space=sflag, size = 0x4, scoped, tag = 'scoped memory for skip_connection.1']
    %10 = vsyncpa [#allocation3], 0
    // Predicated region
    $region2: #{skip_connection.1} parent=1 // pred_check
      _
    $region3: #{skip_connection.1} parent=1 // pred_check_branch
      %12 = sbr.rel (0) target = $region5
    $region4: #{skip_connection.1} parent=1 // pred_region
      _
    $region5: #{skip_connection.1} parent=1 // pred_fallthru
      _
    // Predicated region
    $region6: #{skip_connection.1} parent=1 // pred_check
      _
    $region7: #{skip_connection.1} parent=1 // pred_check_branch
      %14 = sbr.rel (0) target = $region9
    $region8: #{skip_connection.1} parent=1 // pred_region
      _
    $region9: #{skip_connection.1} parent=1 // pred_fallthru
      _
    // Predicated region
    $region10: #{skip_connection.1} parent=1 // pred_check
      _
    $region11: #{skip_connection.1} parent=1 // pred_check_branch
      %16 = sbr.rel (0) target = $region13
    $region12: #{skip_connection.1} parent=1 // pred_region
      _
    $region13: #{skip_connection.1} parent=1 // pred_fallthru
      _
    // Predicated region
    $region14: #{skip_connection.1} parent=1 // pred_check
      _
    $region15: #{skip_connection.1} parent=1 // pred_check_branch
      %18 = sbr.rel (0) target = $region17
    $region16: #{skip_connection.1} parent=1 // pred_region
      _
    $region17: #{skip_connection.1} parent=1 // pred_fallthru
      _
    // Predicated region
    $region18: #{skip_connection.1} parent=1 // pred_check
      _
    $region19: #{skip_connection.1} parent=1 // pred_check_branch
      %20 = sbr.rel (0) target = $region21
    $region20: #{skip_connection.1} parent=1 // pred_region
      _
    $region21: #{skip_connection.1} parent=1 // pred_fallthru
      _
    %v22 = vld [vmem:[%s0] sm:$0xf]
    %v23 = vld [vmem:[%s1] sm:$0xff]
    %v24 = vld [vmem:[%s3] sm:$0xf]
    %v25 = vld [vmem:[%s3 + $0x4] sm:$0xf]
    %v26 = vld [vmem:[%s3 + $0x8] sm:$0xf]
    %v27 = vld [vmem:[%s3 + $0xc] sm:$0xf]
    %v28 = vld [vmem:[%s3 + $0x10] sm:$0xf]
    %v29 = vld [vmem:[%s3 + $0x14] sm:$0xf]
    %v30 = vld [vmem:[%s3 + $0x18] sm:$0xf]
    %v31 = vld [vmem:[%s3 + $0x1c] sm:$0xf]
    %v32 = vld [vmem:[%s3 + $0x20] sm:$0xf]
    %v33 = vld [vmem:[%s3 + $0x24] sm:$0xf]
    %v34 = vld [vmem:[%s3 + $0x28] sm:$0xf]
    %v35 = vld [vmem:[%s3 + $0x2c] sm:$0xf]
    %v36 = vld [vmem:[%s3 + $0x30] sm:$0xf]
    %v37 = vld [vmem:[%s3 + $0x34] sm:$0xf]
    %v38 = vld [vmem:[%s3 + $0x38] sm:$0xf]
    %v39 = vld [vmem:[%s3 + $0x3c] sm:$0xf]
    %v40 = vld [vmem:[%s2] sm:$0xff]
    %v41 = vld [vmem:[%s4] sm:$0x1]
    %43 = vset.pattern.permute.xlu0 0
    %44 = vperm.xlu0 %43, %v40
    %v45 = vpop.permute.xlu0 %44
    %v48 = vlaneseq
    %v49 = vshrl.u32 %v48, 7
    %v50 = vsub.s32 0, %v49
    %v51 = vrot.slane %v41, %v50
    %v53 = vmul.f32 %v45, %v51
    %v54 = vpack.c.bf16 %v23, %v23
    %vm55 = vcmask 64512
    %v57 = vsel %vm55, %v22, 0
    %vm59 = vcmask 1043456
    %v61 = vsel %vm59, %v54, 0
    %63 = vmatprep.subr.bf16.mxu0 0
    %64 = vmatpush1.bf16.msra.mxu0 %v61
    %65 = vmatprep.subr.bf16.mxu0 0
    %66 = vmatpush1.bf16.msra.mxu0 0
    %67 = vmatprep.subr.bf16.mxu0 0
    %68 = vmatpush1.bf16.msra.mxu0 0
    %69 = vmatprep.subr.bf16.mxu0 0
    %70 = vmatpush1.bf16.msra.mxu0 0
    %71 = vmatprep.subr.bf16.mxu0 0
    %72 = vmatpush1.bf16.msra.mxu0 0
    %73 = vmatprep.subr.bf16.mxu0 0
    %74 = vmatpush1.bf16.msra.mxu0 0
    %75 = vmatprep.subr.bf16.mxu0 0
    %76 = vmatpush1.bf16.msra.mxu0 0
    %77 = vmatprep.subr.bf16.mxu0 0
    %78 = vmatpush1.bf16.msra.mxu0 0
    %79 = vmatprep.subr.bf16.mxu0 0
    %80 = vmatpush1.bf16.msra.mxu0 0
    %81 = vmatprep.subr.bf16.mxu0 0
    %82 = vmatpush1.bf16.msra.mxu0 0
    %83 = vmatprep.subr.bf16.mxu0 0
    %84 = vmatpush1.bf16.msra.mxu0 0
    %85 = vmatprep.subr.bf16.mxu0 0
    %86 = vmatpush1.bf16.msra.mxu0 0
    %87 = vmatprep.subr.bf16.mxu0 0
    %88 = vmatpush1.bf16.msra.mxu0 0
    %89 = vmatprep.subr.bf16.mxu0 0
    %90 = vmatpush1.bf16.msra.mxu0 0
    %91 = vmatprep.subr.bf16.mxu0 0
    %92 = vmatpush1.bf16.msra.mxu0 0
    %93 = vmatprep.subr.bf16.mxu0 0
    %94 = vmatpush1.bf16.msra.mxu0 0
    %95 = vmatprep.mubr.bf16.mxu0 0
    %96 = vmatmul.mubr.bf16.gmra.mrb[0].mxu0 %v57
    %v97 = vpop.f32.mrb[0].mxu0
    %v98 = vadd.f32 0.0, %v97
    %v99 = vpop.f32.mrb[0].mxu0
    %v100 = vpop.f32.mrb[0].mxu0
    %v101 = vpop.f32.mrb[0].mxu0
    %102 = vdwg.mxu0
    %v103 = vpack.c.bf16 %v98, %v98
    %v120 = vunpack.c.l.b16 %v24
    %v121 = vunpack.c.l.b16 %v25
    %v122 = vunpack.c.l.b16 %v26
    %v123 = vunpack.c.l.b16 %v27
    %v124 = vunpack.c.l.b16 %v28
    %v125 = vunpack.c.l.b16 %v29
    %v126 = vunpack.c.l.b16 %v30
    %v127 = vunpack.c.l.b16 %v31
    %v128 = vunpack.c.l.b16 %v32
    %v129 = vunpack.c.l.b16 %v33
    %v130 = vunpack.c.l.b16 %v34
    %v131 = vunpack.c.l.b16 %v35
    %v132 = vunpack.c.l.b16 %v36
    %v133 = vunpack.c.l.b16 %v37
    %v134 = vunpack.c.l.b16 %v38
    %v135 = vunpack.c.l.b16 %v39
    %v136 = vpack.c.b16 %v121, %v120
    %v137 = vpack.c.b16 %v123, %v122
    %v138 = vpack.c.b16 %v125, %v124
    %v139 = vpack.c.b16 %v127, %v126
    %v140 = vpack.c.b16 %v129, %v128
    %v141 = vpack.c.b16 %v131, %v130
    %v142 = vpack.c.b16 %v133, %v132
    %v143 = vpack.c.b16 %v135, %v134
    %152 = vmatprep.subr.bf16.mxu0 0
    %153 = vmatpush1.bf16.msra.mxu0 %v136
    %154 = vmatprep.subr.bf16.mxu0 0
    %155 = vmatpush1.bf16.msra.mxu0 %v137
    %156 = vmatprep.subr.bf16.mxu0 0
    %157 = vmatpush1.bf16.msra.mxu0 %v138
    %158 = vmatprep.subr.bf16.mxu0 0
    %159 = vmatpush1.bf16.msra.mxu0 %v139
    %160 = vmatprep.subr.bf16.mxu0 0
    %161 = vmatpush1.bf16.msra.mxu0 %v140
    %162 = vmatprep.subr.bf16.mxu0 0
    %163 = vmatpush1.bf16.msra.mxu0 %v141
    %164 = vmatprep.subr.bf16.mxu0 0
    %165 = vmatpush1.bf16.msra.mxu0 %v142
    %166 = vmatprep.subr.bf16.mxu0 0
    %167 = vmatpush1.bf16.msra.mxu0 %v143
    %168 = vmatprep.subr.bf16.mxu0 0
    %169 = vmatpush1.bf16.msra.mxu0 0
    %170 = vmatprep.subr.bf16.mxu0 0
    %171 = vmatpush1.bf16.msra.mxu0 0
    %172 = vmatprep.subr.bf16.mxu0 0
    %173 = vmatpush1.bf16.msra.mxu0 0
    %174 = vmatprep.subr.bf16.mxu0 0
    %175 = vmatpush1.bf16.msra.mxu0 0
    %176 = vmatprep.subr.bf16.mxu0 0
    %177 = vmatpush1.bf16.msra.mxu0 0
    %178 = vmatprep.subr.bf16.mxu0 0
    %179 = vmatpush1.bf16.msra.mxu0 0
    %180 = vmatprep.subr.bf16.mxu0 0
    %181 = vmatpush1.bf16.msra.mxu0 0
    %182 = vmatprep.subr.bf16.mxu0 0
    %183 = vmatpush1.bf16.msra.mxu0 0
    %184 = vmatprep.mubr.bf16.mxu0 0
    %185 = vmatmul.mubr.bf16.gmra.mrb[0].mxu0 %v103
    %v186 = vpop.f32.mrb[0].mxu0
    %v187 = vadd.f32 %v53, %v186
    %v188 = vpop.f32.mrb[0].mxu0
    %v189 = vpop.f32.mrb[0].mxu0
    %v190 = vpop.f32.mrb[0].mxu0
    %191 = vdwg.mxu0
    %v192 = vmax.f32 %v187, 0.0
    %v193 = vpack.c.bf16 %v192, %v192
    %v195 = vsel %vm59, %v193, 0
    %197 = vmatprep.subr.bf16.mxu0 0
    %198 = vmatpush1.bf16.msra.mxu0 %v195
    %199 = vmatprep.subr.bf16.mxu0 0
    %200 = vmatpush1.bf16.msra.mxu0 0
    %201 = vmatprep.subr.bf16.mxu0 0
    %202 = vmatpush1.bf16.msra.mxu0 0
    %203 = vmatprep.subr.bf16.mxu0 0
    %204 = vmatpush1.bf16.msra.mxu0 0
    %205 = vmatprep.subr.bf16.mxu0 0
    %206 = vmatpush1.bf16.msra.mxu0 0
    %207 = vmatprep.subr.bf16.mxu0 0
    %208 = vmatpush1.bf16.msra.mxu0 0
    %209 = vmatprep.subr.bf16.mxu0 0
    %210 = vmatpush1.bf16.msra.mxu0 0
    %211 = vmatprep.subr.bf16.mxu0 0
    %212 = vmatpush1.bf16.msra.mxu0 0
    %213 = vmatprep.subr.bf16.mxu0 0
    %214 = vmatpush1.bf16.msra.mxu0 0
    %215 = vmatprep.subr.bf16.mxu0 0
    %216 = vmatpush1.bf16.msra.mxu0 0
    %217 = vmatprep.subr.bf16.mxu0 0
    %218 = vmatpush1.bf16.msra.mxu0 0
    %219 = vmatprep.subr.bf16.mxu0 0
    %220 = vmatpush1.bf16.msra.mxu0 0
    %221 = vmatprep.subr.bf16.mxu0 0
    %222 = vmatpush1.bf16.msra.mxu0 0
    %223 = vmatprep.subr.bf16.mxu0 0
    %224 = vmatpush1.bf16.msra.mxu0 0
    %225 = vmatprep.subr.bf16.mxu0 0
    %226 = vmatpush1.bf16.msra.mxu0 0
    %227 = vmatprep.subr.bf16.mxu0 0
    %228 = vmatpush1.bf16.msra.mxu0 0
    %229 = vmatprep.mubr.bf16.mxu0 0
    %230 = vmatmul.mubr.bf16.gmra.mrb[0].mxu0 %v57
    %v231 = vpop.f32.mrb[0].mxu0
    %v232 = vadd.f32 0.0, %v231
    %v233 = vpop.f32.mrb[0].mxu0
    %v234 = vpop.f32.mrb[0].mxu0
    %v235 = vpop.f32.mrb[0].mxu0
    %236 = vdwg.mxu0
    %v237 = vpack.c.bf16 %v232, %v232
    %238 = vmatprep.subr.bf16.mxu0 0
    %239 = vmatpush1.bf16.msra.mxu0 %v136
    %240 = vmatprep.subr.bf16.mxu0 0
    %241 = vmatpush1.bf16.msra.mxu0 %v137
    %242 = vmatprep.subr.bf16.mxu0 0
    %243 = vmatpush1.bf16.msra.mxu0 %v138
    %244 = vmatprep.subr.bf16.mxu0 0
    %245 = vmatpush1.bf16.msra.mxu0 %v139
    %246 = vmatprep.subr.bf16.mxu0 0
    %247 = vmatpush1.bf16.msra.mxu0 %v140
    %248 = vmatprep.subr.bf16.mxu0 0
    %249 = vmatpush1.bf16.msra.mxu0 %v141
    %250 = vmatprep.subr.bf16.mxu0 0
    %251 = vmatpush1.bf16.msra.mxu0 %v142
    %252 = vmatprep.subr.bf16.mxu0 0
    %253 = vmatpush1.bf16.msra.mxu0 %v143
    %254 = vmatprep.subr.bf16.mxu0 0
    %255 = vmatpush1.bf16.msra.mxu0 0
    %256 = vmatprep.subr.bf16.mxu0 0
    %257 = vmatpush1.bf16.msra.mxu0 0
    %258 = vmatprep.subr.bf16.mxu0 0
    %259 = vmatpush1.bf16.msra.mxu0 0
    %260 = vmatprep.subr.bf16.mxu0 0
    %261 = vmatpush1.bf16.msra.mxu0 0
    %262 = vmatprep.subr.bf16.mxu0 0
    %263 = vmatpush1.bf16.msra.mxu0 0
    %264 = vmatprep.subr.bf16.mxu0 0
    %265 = vmatpush1.bf16.msra.mxu0 0
    %266 = vmatprep.subr.bf16.mxu0 0
    %267 = vmatpush1.bf16.msra.mxu0 0
    %268 = vmatprep.subr.bf16.mxu0 0
    %269 = vmatpush1.bf16.msra.mxu0 0
    %270 = vmatprep.mubr.bf16.mxu0 0
    %271 = vmatmul.mubr.bf16.gmra.mrb[0].mxu0 %v237
    %v272 = vpop.f32.mrb[0].mxu0
    %v273 = vadd.f32 %v53, %v272
    %v274 = vpop.f32.mrb[0].mxu0
    %v275 = vpop.f32.mrb[0].mxu0
    %v276 = vpop.f32.mrb[0].mxu0
    %277 = vdwg.mxu0
    %v278 = vmax.f32 %v273, 0.0
    %v279 = vadd.f32 %v23, %v278
    %280 = vst [vmem:[#allocation2] sm:$0xff] %v279
    // Predicated region
    $region22: #{skip_connection.1} parent=1 // pred_check
      _
    $region23: #{skip_connection.1} parent=1 // pred_check_branch
      %282 = sbr.rel (0) target = $region25
    $region24: #{skip_connection.1} parent=1 // pred_region
      %s284 = ssub.s32 128, 128
      %285 = vsyncadd [#allocation3], %s284
      %s287 = sshll.u32 [#allocation2], 4
      %s288 = int_to_ptr.vmem [resolvable:$true] %s287
      %290 = dma.vmem_to_hbm [thread:$0]  %s288, 128, %s5, [#allocation3]
    $region25: #{skip_connection.1} parent=1 // pred_fallthru
      _
    // Predicated region
    $region26: #{skip_connection.1} parent=1 // pred_check
      _
    $region27: #{skip_connection.1} parent=1 // pred_check_branch
      %292 = sbr.rel (0) target = $region29
    $region28: #{skip_connection.1} parent=1 // pred_region
      %293 = dma.done [#allocation3], 128
    $region29: #{skip_connection.1} parent=1 // pred_fallthru
      _
    %294 = vsyncpa [#allocation3], 1

</llo_original>
